<compile_context>
chip_gen: v5e
topology: v5e:2x2
jax: 0.10.0
libtpu: 0.0.40
codegen_flags: <defaults>
</compile_context>

<pallas_src>
import functools

import jax
import jax.numpy as jnp
from jax.experimental import pallas as pl
from jax.experimental.pallas import tpu as pltpu

EPS = 1e-5          # PyTorch LayerNorm default
NEG_INF = -1e30     # additive mask for padded key columns


def _round_up(x, m):
    return (x + m - 1) // m * m


def _layernorm(x, g, b):
    # x: (..., W) f32, g/b: (1, W) f32
    mu = jnp.mean(x, axis=-1, keepdims=True)
    var = jnp.mean(jnp.square(x - mu), axis=-1, keepdims=True)
    return (x - mu) * jax.lax.rsqrt(var + EPS) * g + b


def _default_vmem_limit():
    # Generation-aware: ~3/4 of physical VMEM (96 MiB on v5e/v6e, 48 MiB on v7x).
    try:
        info = pltpu.get_tpu_info()
        cap = getattr(info, "vmem_capacity_bytes", None)
        if cap:
            return min(int(cap) * 3 // 4, 112 * 1024 * 1024)
    except Exception:
        pass
    return 48 * 1024 * 1024


# ----------------------------- kernels --------------------------------------


def _patch_embed_kernel(p_ref, w_ref, o_ref):
    # p: (rt, C*k*k) bf16, w: (C*k*k, width) bf16 -> o: (rt, width) bf16
    o_ref[...] = jnp.dot(p_ref[...], w_ref[...],
                         preferred_element_type=jnp.float32).astype(o_ref.dtype)


def _encoder_kernel(x_ref, mask_ref, pos_ref, lnpre_g_ref, lnpre_b_ref,
                    lnpost_g_ref, lnpost_b_ref,
                    ln1g_ref, ln1b_ref, wq_ref, wk_ref, wv_ref,
                    bq_ref, bk_ref, bv_ref, wo_ref, bo_ref,
                    ln2g_ref, ln2b_ref, w1_ref, b1_ref, w2_ref, b2_ref,
                    cls_ref, xbuf_ref, ctx_ref, *, num_heads, mlp_chunk):
    """One grid step = (image-group bi, layer l).

    The residual stream for Bt images is carried in VMEM scratch across the
    inner ("arbitrary") layer axis; per-layer weights are stacked (L, ...) and
    prefetched by the BlockSpec pipeline.
    """
    l = pl.program_id(1)
    Bt, Sp, W = xbuf_ref.shape
    dh = W // num_heads
    scale = dh ** (-0.5)

    @pl.when(l == 0)
    def _():
        # fused: embeddings + positional embedding + ln_pre (once per image group)
        xb = x_ref[...].astype(jnp.float32) + pos_ref[...]
        xbuf_ref[...] = _layernorm(xb, lnpre_g_ref[...], lnpre_b_ref[...])

    x3 = xbuf_ref[...]                                # (Bt, Sp, W) f32
    xf = x3.reshape(Bt * Sp, W)                       # flattened residual stream
    mask = mask_ref[...]                              # (1, Sp): 0 valid / -1e30 pad key

    # --- x = x + attn(ln_1(x)) ---
    h = _layernorm(xf, ln1g_ref[0], ln1b_ref[0]).astype(jnp.bfloat16)
    # split q/k/v projections (no (Sp,3W) f32 intermediate); scale folded onto q
    q = ((jnp.dot(h, wq_ref[0], preferred_element_type=jnp.float32) + bq_ref[0])
         * scale).astype(jnp.bfloat16)
    k = (jnp.dot(h, wk_ref[0], preferred_element_type=jnp.float32)
         + bk_ref[0]).astype(jnp.bfloat16)
    v = (jnp.dot(h, wv_ref[0], preferred_element_type=jnp.float32)
         + bv_ref[0]).astype(jnp.bfloat16)

    # per-image, per-head attention; ctx stored to VMEM to bound live ranges
    for b in range(Bt):
        rs = slice(b * Sp, (b + 1) * Sp)
        for i in range(num_heads):
            cs = slice(i * dh, (i + 1) * dh)
            s = jax.lax.dot_general(q[rs, cs], k[rs, cs],
                                    (((1,), (1,)), ((), ())),
                                    preferred_element_type=jnp.float32)
            s = s + mask
            s = s - jnp.max(s, axis=-1, keepdims=True)
            e = jnp.exp(s)
            denom = jnp.sum(e, axis=-1, keepdims=True)
            p = (e * pl.reciprocal(denom, approx=True)).astype(jnp.bfloat16)
            ctx_ref[b, :, cs] = jnp.dot(p, v[rs, cs],
                                        preferred_element_type=jnp.float32)

    # single full-depth out-projection (K = W) instead of H K=dh matmuls
    attn = jnp.dot(ctx_ref[...].reshape(Bt * Sp, W).astype(jnp.bfloat16),
                   wo_ref[0], preferred_element_type=jnp.float32) + bo_ref[0]
    xf = xf + attn

    # --- x = x + mlp(ln_2(x)) ---  (hidden dim chunked; QuickGELU is elementwise)
    h2 = _layernorm(xf, ln2g_ref[0], ln2b_ref[0]).astype(jnp.bfloat16)
    hidden = w1_ref.shape[2]
    ch = mlp_chunk if (mlp_chunk and hidden % mlp_chunk == 0 and mlp_chunk < hidden) else hidden
    for c in range(hidden // ch):
        cs = slice(c * ch, (c + 1) * ch)
        m = jnp.dot(h2, w1_ref[0, :, cs],
                    preferred_element_type=jnp.float32) + b1_ref[0, :, cs]
        m = m * jax.nn.sigmoid(1.702 * m)             # CLIP QuickGELU (f32)
        xf = xf + jnp.dot(m.astype(jnp.bfloat16), w2_ref[0, cs, :],
                          preferred_element_type=jnp.float32)
    xf = xf + b2_ref[0]

    x3 = xf.reshape(Bt, Sp, W)
    xbuf_ref[...] = x3                                # carry to layer l+1
    # fused ln_post on the per-layer CLS rows
    cls_ref[0, 0] = _layernorm(x3[:, 0, :], lnpost_g_ref[...], lnpost_b_ref[...])


# ----------------------------- wrappers --------------------------------------


def patch_embed(patches_bf16, w_bf16, *, row_tile=512):
    """conv1 (stride == kernel == patch, no bias) as a row-tiled bf16 matmul."""
    n, ckk = patches_bf16.shape
    width = w_bf16.shape[1]
    rt = row_tile if n >= row_tile else _round_up(n, 8)
    n_pad = _round_up(n, rt)
    if n_pad != n:
        patches_bf16 = jnp.pad(patches_bf16, ((0, n_pad - n), (0, 0)))
    out = pl.pallas_call(
        _patch_embed_kernel,
        out_shape=jax.ShapeDtypeStruct((n_pad, width), jnp.bfloat16),
        grid=(n_pad // rt,),
        in_specs=[pl.BlockSpec((rt, ckk), lambda i: (i, 0)),
                  pl.BlockSpec((ckk, width), lambda i: (0, 0))],
        out_specs=pl.BlockSpec((rt, width), lambda i: (i, 0)),
        compiler_params=pltpu.CompilerParams(dimension_semantics=("parallel",)),
    )(patches_bf16, w_bf16)
    return out[:n]


_WEIGHT_ORDER = ("ln1g", "ln1b", "wq", "wk", "wv", "bq", "bk", "bv",
                 "wo", "bo", "ln2g", "ln2b", "w1", "b1", "w2", "b2")


def transformer_collect_cls(x, mask, pos, lnpre_g, lnpre_b, lnpost_g, lnpost_b,
                            stacked, *, num_heads, batch_tile, mlp_chunk,
                            vmem_limit_bytes=None):
    """All L residual blocks (+ln_pre/+ln_post) in one pallas_call.

    Returns per-layer, per-image ln_post(CLS) of shape (L, B, W) f32.
    """
    Bp, Sp, W = x.shape
    L = stacked["wq"].shape[0]
    Bt = batch_tile
    assert Bp % Bt == 0
    weights = [stacked[name] for name in _WEIGHT_ORDER]     # all rank-3 (L, r, c)
    if vmem_limit_bytes is None:
        vmem_limit_bytes = _default_vmem_limit()

    const_specs = [
        pl.BlockSpec((Bt, Sp, W), lambda b, l: (b, 0, 0)),   # embeddings (read at l==0)
        pl.BlockSpec((1, Sp), lambda b, l: (0, 0)),          # key-padding mask
        pl.BlockSpec((Sp, W), lambda b, l: (0, 0)),          # positional embedding
        pl.BlockSpec((1, W), lambda b, l: (0, 0)),           # ln_pre gamma
        pl.BlockSpec((1, W), lambda b, l: (0, 0)),           # ln_pre beta
        pl.BlockSpec((1, W), lambda b, l: (0, 0)),           # ln_post gamma
        pl.BlockSpec((1, W), lambda b, l: (0, 0)),           # ln_post beta
    ]
    weight_specs = [pl.BlockSpec((1,) + w.shape[1:], lambda b, l: (l, 0, 0))
                    for w in weights]

    cls = pl.pallas_call(
        functools.partial(_encoder_kernel, num_heads=num_heads, mlp_chunk=mlp_chunk),
        out_shape=jax.ShapeDtypeStruct((L, Bp // Bt, Bt, W), jnp.float32),
        grid=(Bp // Bt, L),                                  # image-group outer, layer inner
        in_specs=const_specs + weight_specs,
        out_specs=pl.BlockSpec((1, 1, Bt, W), lambda b, l: (l, b, 0, 0)),
        scratch_shapes=[pltpu.VMEM((Bt, Sp, W), jnp.float32),   # carried residual stream
                        pltpu.VMEM((Bt, Sp, W), jnp.float32)],  # per-head ctx staging
        compiler_params=pltpu.CompilerParams(
            dimension_semantics=("parallel", "arbitrary"),
            vmem_limit_bytes=vmem_limit_bytes),
    )(x, mask, pos, lnpre_g, lnpre_b, lnpost_g, lnpost_b, *weights)
    return cls.reshape(L, Bp, W)


# ----------------------------- forward + params ------------------------------


def image_encoder_forward(image, params, *, patch, num_heads,
                          batch_tile=2, mlp_chunk=1024):
    """Equivalent of ImageEncoder.forward. image: NCHW, returns (layers, B, width) f16."""
    B, C, H, Wimg = image.shape
    Hp, Wp = H // patch, Wimg // patch
    P = Hp * Wp
    S = P + 1
    Sp = _round_up(S, 128)                 # lane-dense padded sequence length
    width = params["conv1_w"].shape[0]

    x = image.astype(jnp.float32)          # TODO(synk): CLIP runs fp16; bf16/f32 used on TPU.

    # conv1 as patch-extract + bf16 matmul (bf16 activations feed the next stage).
    patches = x.reshape(B, C, Hp, patch, Wp, patch).transpose(0, 2, 4, 1, 3, 5)
    patches = patches.reshape(B * P, C * patch * patch).astype(jnp.bfloat16)
    wconv = params["conv1_w"].reshape(width, C * patch * patch).T.astype(jnp.bfloat16)
    pe = patch_embed(patches, wconv).reshape(B, P, width)                 # bf16

    # class token, zero-pad the sequence to Sp (lane-dense).
    cls_tok = jnp.broadcast_to(
        params["class_embedding"].astype(jnp.bfloat16).reshape(1, 1, width),
        (B, 1, width))
    x = jnp.concatenate([cls_tok, pe], axis=1)                            # (B, S, W)
    x = jnp.pad(x, ((0, 0), (0, Sp - S), (0, 0)))                         # (B, Sp, W)

    # pad the batch to a multiple of the image tile (padded images are sliced off).
    Bt = max(1, min(batch_tile, B))
    Bp = _round_up(B, Bt)
    if Bp != B:
        x = jnp.pad(x, ((0, Bp - B), (0, 0), (0, 0)))

    pos = jnp.pad(params["positional_embedding"],
                  ((0, Sp - S), (0, 0))).astype(jnp.float32)
    # additive mask: padded key columns get -1e30 so valid rows never attend to them.
    mask = jnp.where(jnp.arange(Sp)[None, :] < S, 0.0, NEG_INF).astype(jnp.float32)

    feats = transformer_collect_cls(
        x, mask, pos,
        params["ln_pre_g"], params["ln_pre_b"],
        params["ln_post_g"], params["ln_post_b"],
        params["layers"], num_heads=num_heads, batch_tile=Bt, mlp_chunk=mlp_chunk)
    return feats[:, :B].astype(jnp.float16)                               # (L, B, W) fp16


def init_params(key, *, width, patch, channels, seq_len, layers, mlp_ratio=4):
    keys = jax.random.split(key, 10)
    std = 0.02
    hidden = mlp_ratio * width

    def nrm(k, shape, dtype=jnp.float32):
        return (std * jax.random.normal(k, shape)).astype(dtype)

    # Per-layer weights are stacked with a leading L axis so the fused transformer
    # kernel's BlockSpec can prefetch layer l+1 while layer l computes.  Matmul
    # weights are pre-transposed to (in, out), stored bf16; q/k/v are split so the
    # kernel never materializes a (Sp, 3W) intermediate.
    layer_params = {
        "ln1g": jnp.ones((layers, 1, width), jnp.float32),
        "ln1b": jnp.zeros((layers, 1, width), jnp.float32),
        "wq": nrm(keys[3], (layers, width, width), jnp.bfloat16),     # in_proj[:W].T
        "wk": nrm(keys[4], (layers, width, width), jnp.bfloat16),     # in_proj[W:2W].T
        "wv": nrm(keys[5], (layers, width, width), jnp.bfloat16),     # in_proj[2W:].T
        "bq": jnp.zeros((layers, 1, width), jnp.float32),
        "bk": jnp.zeros((layers, 1, width), jnp.float32),
        "bv": jnp.zeros((layers, 1, width), jnp.float32),
        "wo": nrm(keys[6], (layers, width, width), jnp.bfloat16),     # out_proj.weight.T
        "bo": jnp.zeros((layers, 1, width), jnp.float32),
        "ln2g": jnp.ones((layers, 1, width), jnp.float32),
        "ln2b": jnp.zeros((layers, 1, width), jnp.float32),
        "w1": nrm(keys[7], (layers, width, hidden), jnp.bfloat16),    # c_fc.weight.T
        "b1": jnp.zeros((layers, 1, hidden), jnp.float32),
        "w2": nrm(keys[8], (layers, hidden, width), jnp.bfloat16),    # c_proj.weight.T
        "b2": jnp.zeros((layers, 1, width), jnp.float32),
    }
    params = {
        "conv1_w": nrm(keys[0], (width, channels, patch, patch)),
        "class_embedding": nrm(keys[1], (width,)),
        "positional_embedding": nrm(keys[2], (seq_len, width)),
        "ln_pre_g": jnp.ones((1, width), jnp.float32),
        "ln_pre_b": jnp.zeros((1, width), jnp.float32),
        "ln_post_g": jnp.ones((1, width), jnp.float32),
        "ln_post_b": jnp.zeros((1, width), jnp.float32),
        "layers": layer_params,
    }
    return params


if __name__ == "__main__":
    # Small ViT-style config consistent with the module's forward pass.
    B, C, H, W_img = 2, 3, 16, 16
    patch = 8
    width = 64
    num_heads = 2
    layers = 3
    seq = (H // patch) * (W_img // patch) + 1  # 4 patches + CLS = 5

    key = jax.random.PRNGKey(0)
    k_img, k_par = jax.random.split(key)
    image = jax.random.normal(k_img, (B, C, H, W_img), dtype=jnp.float32)
    params = init_params(k_par, width=width, patch=patch, channels=C,
                         seq_len=seq, layers=layers)

    out = image_encoder_forward(image, params, patch=patch, num_heads=num_heads,
                                batch_tile=2)
    out = jax.block_until_ready(out)

    assert out.shape == (layers, B, width), out.shape
    assert out.dtype == jnp.float16, out.dtype
    print("KERNEL_OK")
</pallas_src>

<mosaic_0001>
module attributes {stable_mosaic.version = 11 : i64} {
  func.func @_patch_embed_kernel(%arg0: i32, %arg1: memref<8x192xbf16, #tpu.memory_space<vmem>>, %arg2: memref<192x64xbf16, #tpu.memory_space<vmem>>, %arg3: memref<8x64xbf16, #tpu.memory_space<vmem>>) attributes {dimension_semantics = [#tpu.dimension_semantics<parallel>], iteration_bounds = array<i64: 1>, scalar_prefetch = 0 : i64, scratch_operands = 0 : i64, tpu.core_type = #tpu.core_type<tc>, window_params = [{transform_indices = @transform_0, window_bounds = array<i64: 8, 192>}, {pipeline_mode = #tpu.pipeline_mode<synchronous>, transform_indices = @transform_1, window_bounds = array<i64: 192, 64>}, {transform_indices = @transform_2, window_bounds = array<i64: 8, 64>}]} {
    %c0 = arith.constant 0 : index
    %c0_0 = arith.constant 0 : index
    %0 = vector.load %arg1[%c0, %c0_0] : memref<8x192xbf16, #tpu.memory_space<vmem>>, vector<8x192xbf16>
    %c0_1 = arith.constant 0 : index
    %c0_2 = arith.constant 0 : index
    %1 = vector.load %arg2[%c0_1, %c0_2] : memref<192x64xbf16, #tpu.memory_space<vmem>>, vector<192x64xbf16>
    %cst = arith.constant dense<0.000000e+00> : vector<8x64xf32>
    %2 = tpu.matmul %0, %1, %cst {dimension_numbers = #tpu.dot_dimension_numbers<[1], [0], [0], [1], [0, 0, 1, 1], [], []>} : vector<8x192xbf16>, vector<192x64xbf16>, vector<8x64xf32> -> vector<8x64xf32>
    %3 = arith.truncf %2 : vector<8x64xf32> to vector<8x64xbf16>
    %c0_3 = arith.constant 0 : index
    %c0_4 = arith.constant 0 : index
    %4 = vector.load %arg3[%c0_3, %c0_4] : memref<8x64xbf16, #tpu.memory_space<vmem>>, vector<8x64xbf16>
    tpu.vector_store %arg3[%c0_3, %c0_4], %3 {strides = array<i32>} : memref<8x64xbf16, #tpu.memory_space<vmem>>, vector<8x64xbf16>,
    return
  }
  func.func @transform_0(%arg0: i32) -> (i32, i32) {
    %c0_i32 = arith.constant 0 : i32
    %c0_i32_0 = arith.constant 0 : i32
    return %arg0, %c0_i32 : i32, i32
  }
  func.func @transform_1(%arg0: i32) -> (i32, i32) {
    %c0_i32 = arith.constant 0 : i32
    %c0_i32_0 = arith.constant 0 : i32
    %c0_i32_1 = arith.constant 0 : i32
    return %c0_i32, %c0_i32_0 : i32, i32
  }
  func.func @transform_2(%arg0: i32) -> (i32, i32) {
    %c0_i32 = arith.constant 0 : i32
    %c0_i32_0 = arith.constant 0 : i32
    return %arg0, %c0_i32 : i32, i32
  }
}

</mosaic_0001>

<llo_original>
// kernel: tpu_custom_call.1
$region0: #{tpu_custom_call.1}
  #allocation0 [shape = 'u32[]', space=smem, size = 0x4, offset = 0x4, fixed_abs, tag = 'smem constant byte address 0x4 - core index']
  #allocation1 [shape = 'u32[72,128]{1,0:T(1,128)}', space=vmem, size = 0x9000, scoped, tag = 'internal scratch']
  %s0 = inlined_call_operand.vmem [shape: bf16[8,192], index: 0, kind: input, shape index: {}]
  %s1 = inlined_call_operand.vmem [shape: bf16[192,64], index: 1, kind: input, shape index: {}]
  %s2 = inlined_call_operand.hbm [shape: bf16[8,64], index: 2, kind: output, shape index: {}]
  %s3 = sld [smem:[#allocation0]]
  $region18: #{tpu_custom_call.1} parent=0
    _
  %s5 = ssub.s32 1, %s3
  %s6 = scalar_select 0, %s5, %s3
  $region1: #{tpu_custom_call.1} parent=0
    #allocation2 [shape = 'u8[2048]{0}', space=vmem, size = 0x800, scoped, tag = 'output window, operand 0, single buffered']
    #allocation3 [shape = 's32[1]{0}', space=sflag, size = 0x4, scoped, tag = 'scoped memory for tpu_custom_call.1']
    %7 = vsyncpa [#allocation3], 0
    // Predicated region
    $region2: #{tpu_custom_call.1} parent=1 // pred_check
      _
    $region3: #{tpu_custom_call.1} parent=1 // pred_check_branch
      %9 = sbr.rel (0) target = $region5
    $region4: #{tpu_custom_call.1} parent=1 // pred_region
      _
    $region5: #{tpu_custom_call.1} parent=1 // pred_fallthru
      _
    // Predicated region
    $region6: #{tpu_custom_call.1} parent=1 // pred_check
      _
    $region7: #{tpu_custom_call.1} parent=1 // pred_check_branch
      %11 = sbr.rel (0) target = $region9
    $region8: #{tpu_custom_call.1} parent=1 // pred_region
      _
    $region9: #{tpu_custom_call.1} parent=1 // pred_fallthru
      _
    %v13 = vld [vmem:[%s0] sm:$0xff]
    %v14 = vld [vmem:[%s1] sm:$0xf]
    %v15 = vld [vmem:[%s1 + $0x4] sm:$0xf]
    %v16 = vld [vmem:[%s1 + $0x8] sm:$0xf]
    %v17 = vld [vmem:[%s1 + $0xc] sm:$0xf]
    %v18 = vld [vmem:[%s1 + $0x10] sm:$0xf]
    %v19 = vld [vmem:[%s1 + $0x14] sm:$0xf]
    %v20 = vld [vmem:[%s1 + $0x18] sm:$0xf]
    %v21 = vld [vmem:[%s1 + $0x1c] sm:$0xf]
    %v22 = vld [vmem:[%s1 + $0x20] sm:$0xf]
    %v23 = vld [vmem:[%s1 + $0x24] sm:$0xf]
    %v24 = vld [vmem:[%s1 + $0x28] sm:$0xf]
    %v25 = vld [vmem:[%s1 + $0x2c] sm:$0xf]
    %v26 = vld [vmem:[%s1 + $0x30] sm:$0xf]
    %v27 = vld [vmem:[%s1 + $0x34] sm:$0xf]
    %v28 = vld [vmem:[%s1 + $0x38] sm:$0xf]
    %v29 = vld [vmem:[%s1 + $0x3c] sm:$0xf]
    %v30 = vld [vmem:[%s1 + $0x40] sm:$0xf]
    %v31 = vld [vmem:[%s1 + $0x44] sm:$0xf]
    %v32 = vld [vmem:[%s1 + $0x48] sm:$0xf]
    %v33 = vld [vmem:[%s1 + $0x4c] sm:$0xf]
    %v34 = vld [vmem:[%s1 + $0x50] sm:$0xf]
    %v35 = vld [vmem:[%s1 + $0x54] sm:$0xf]
    %v36 = vld [vmem:[%s1 + $0x58] sm:$0xf]
    %v37 = vld [vmem:[%s1 + $0x5c] sm:$0xf]
    %v39 = vunpack.c.l.b16 %v13
    %v40 = vunpack.c.h.b16 %v13
    %v41 = vpack.c.b16 %v39, %v39
    %v42 = vpack.c.b16 %v40, %v40
    %v68 = vunpack.c.l.b16 %v14
    %v69 = vunpack.c.l.b16 %v15
    %v70 = vunpack.c.l.b16 %v16
    %v71 = vunpack.c.l.b16 %v17
    %v72 = vunpack.c.l.b16 %v18
    %v73 = vunpack.c.l.b16 %v19
    %v74 = vunpack.c.l.b16 %v20
    %v75 = vunpack.c.l.b16 %v21
    %v76 = vunpack.c.l.b16 %v22
    %v77 = vunpack.c.l.b16 %v23
    %v78 = vunpack.c.l.b16 %v24
    %v79 = vunpack.c.l.b16 %v25
    %v80 = vunpack.c.l.b16 %v26
    %v81 = vunpack.c.l.b16 %v27
    %v82 = vunpack.c.l.b16 %v28
    %v83 = vunpack.c.l.b16 %v29
    %v84 = vunpack.c.l.b16 %v30
    %v85 = vunpack.c.l.b16 %v31
    %v86 = vunpack.c.l.b16 %v32
    %v87 = vunpack.c.l.b16 %v33
    %v88 = vunpack.c.l.b16 %v34
    %v89 = vunpack.c.l.b16 %v35
    %v90 = vunpack.c.l.b16 %v36
    %v91 = vunpack.c.l.b16 %v37
    %v92 = vpack.c.b16 %v69, %v68
    %v93 = vpack.c.b16 %v71, %v70
    %v94 = vpack.c.b16 %v73, %v72
    %v95 = vpack.c.b16 %v75, %v74
    %v96 = vpack.c.b16 %v77, %v76
    %v97 = vpack.c.b16 %v79, %v78
    %v98 = vpack.c.b16 %v81, %v80
    %v99 = vpack.c.b16 %v83, %v82
    %v100 = vpack.c.b16 %v85, %v84
    %v101 = vpack.c.b16 %v87, %v86
    %v102 = vpack.c.b16 %v89, %v88
    %v103 = vpack.c.b16 %v91, %v90
    %vm116 = vcmask 523264
    %v118 = vsel %vm116, %v42, 0
    %120 = vmatpush.bf16.msra.mxu0 %v99
    %121 = vmatpush.bf16.msra.mxu0 %v98
    %122 = vmatpush.bf16.msra.mxu0 %v97
    %123 = vmatpush.bf16.msra.mxu0 %v96
    %124 = vmatpush.bf16.msra.mxu0 %v95
    %125 = vmatpush.bf16.msra.mxu0 %v94
    %126 = vmatpush.bf16.msra.mxu0 %v93
    %127 = vmatpush.bf16.msra.mxu0 %v92
    %128 = vmatmul.bf16.gmra.mxu0 %v41
    %v129 = vpop.f32.mrf.mxu0
    %v130 = vadd.f32 0.0, %v129
    %v131 = vpop.f32.mrf.mxu0
    %132 = vdwg.mxu0
    %133 = vmatpush.bf16.msra.mxu0 0
    %134 = vmatpush.bf16.msra.mxu0 0
    %135 = vmatpush.bf16.msra.mxu0 0
    %136 = vmatpush.bf16.msra.mxu0 0
    %137 = vmatpush.bf16.msra.mxu0 %v103
    %138 = vmatpush.bf16.msra.mxu0 %v102
    %139 = vmatpush.bf16.msra.mxu0 %v101
    %140 = vmatpush.bf16.msra.mxu0 %v100
    %141 = vmatmul.bf16.gmra.mxu0 %v118
    %v142 = vpop.f32.mrf.mxu0
    %v143 = vadd.f32 %v130, %v142
    %v144 = vpop.f32.mrf.mxu0
    %145 = vdwg.mxu0
    %v146 = vpack.c.bf16 %v143, %v143
    %vm147 = vcmask 519168
    %148 = vst.msk [vmem:[#allocation2] sm:$0xf] %vm147, %v146
    // Predicated region
    $region10: #{tpu_custom_call.1} parent=1 // pred_check
      _
    $region11: #{tpu_custom_call.1} parent=1 // pred_check_branch
      %150 = sbr.rel (0) target = $region13
    $region12: #{tpu_custom_call.1} parent=1 // pred_region
      %152 = vsyncadd [#allocation3], 0
      %s154 = sshll.u32 [#allocation2], 4
      %s155 = int_to_ptr.vmem [resolvable:$true] %s154
      %s156 = sshll.u32 %s2, 4
      %s157 = int_to_ptr.hbm [resolvable:$true] %s156
      %159 = dma.vmem_to_hbm [thread:$0]  %s155, 64, %s157, [#allocation3]
    $region13: #{tpu_custom_call.1} parent=1 // pred_fallthru
      _
    // Predicated region
    $region14: #{tpu_custom_call.1} parent=1 // pred_check
      _
    $region15: #{tpu_custom_call.1} parent=1 // pred_check_branch
      %161 = sbr.rel (0) target = $region17
    $region16: #{tpu_custom_call.1} parent=1 // pred_region
      %163 = dma.done [#allocation3], 64
    $region17: #{tpu_custom_call.1} parent=1 // pred_fallthru
      _
    %164 = vsyncpa [#allocation3], 1

</llo_original>
